<compile_context>
chip_gen: v5e
topology: v5e:2x2
jax: 0.10.0
libtpu: 0.0.40
codegen_flags: <defaults>
</compile_context>

<pallas_src>
import functools

import jax
import jax.numpy as jnp
from jax.experimental import pallas as pl
from jax.experimental.pallas import tpu as pltpu


def _round_up(x: int, m: int) -> int:
    return ((x + m - 1) // m) * m


def _best_tile(total: int, base: int, cap: int) -> int:
    """Largest multiple of `base` that divides `total` and is <= cap.

    `total` must already be a multiple of `base`.  Picking an exact divisor
    avoids any padding waste beyond the minimal lane/sublane alignment.
    """
    units = total // base
    for d in range(min(units, max(1, cap // base)), 0, -1):
        if units % d == 0:
            return d * base
    return base


# ---------------------------------------------------------------------------
# Kernels  (grid = (i over M-tiles, j over N-tiles, k over K-tiles))
# ---------------------------------------------------------------------------

def _linear_kernel_f32out(x_ref, w_ref, b_ref, o_ref):
    """f32-output path: o_ref is resident across k (its index_map ignores k),
    so accumulate directly into it — no scratch, no zero-init, no copy epilogue.
    """
    k = pl.program_id(2)
    partial = jnp.dot(x_ref[...], w_ref[...], preferred_element_type=jnp.float32)

    @pl.when(k == 0)
    def _():
        o_ref[...] = partial

    @pl.when(k != 0)
    def _():
        o_ref[...] += partial

    @pl.when(k == pl.num_programs(2) - 1)
    def _():
        o_ref[...] += b_ref[...]          # bias (1, tn) broadcasts over rows


def _linear_kernel_acc(x_ref, w_ref, b_ref, o_ref, acc_ref):
    """Narrow-output path (e.g. bf16 activations): keep a f32 VMEM accumulator."""
    k = pl.program_id(2)

    @pl.when(k == 0)
    def _():
        acc_ref[...] = jnp.zeros_like(acc_ref)

    acc_ref[...] += jnp.dot(x_ref[...], w_ref[...],
                            preferred_element_type=jnp.float32)

    @pl.when(k == pl.num_programs(2) - 1)
    def _():
        o_ref[...] = (acc_ref[...] + b_ref[...]).astype(o_ref.dtype)


# ---------------------------------------------------------------------------
# Wrappers
# ---------------------------------------------------------------------------

def prepare_classifier_params(weight, bias, operand_dtype=None):
    """One-time parameter preparation, hoisted out of the per-call hot path.

    weight: (C, F) in PyTorch nn.Linear layout, bias: (C,).
    Returns (w_fc, b_row): weight transposed to (F_p, C_p) and zero-padded so
    both dims are multiples of 128, bias as a f32 (1, C_p) row.
    NOTE: the F/K zero-padding is load-bearing — garbage in the K tail would be
    accumulated into valid outputs.  Call once and cache the result so the
    pad/transpose/cast HBM pass is not paid on every forward call.
    """
    C, F = weight.shape
    F_p = _round_up(F, 128)
    C_p = _round_up(C, 128)
    w_fc = jnp.transpose(weight)                      # (F, C): standard contraction
    if operand_dtype is not None:
        w_fc = w_fc.astype(operand_dtype)             # e.g. bf16 weight storage
    # TODO(synk): optional fp8 (e4m3) weight storage + epilogue scales for v7x.
    w_fc = jnp.pad(w_fc, ((0, F_p - F), (0, C_p - C)))
    b_row = jnp.pad(bias.astype(jnp.float32).reshape(1, C),
                    ((0, 0), (0, C_p - C)))
    return w_fc, b_row


@functools.partial(jax.jit, static_argnames=("num_classes",))
def classifier_forward(x, w_fc, b_row, *, num_classes):
    """y = x @ W.T + b  (PyTorch nn.Linear semantics), using prepared params."""
    B, F = x.shape
    F_p, C_p = w_fc.shape
    assert F <= F_p and num_classes <= C_p
    out_dtype = x.dtype
    op_dtype = w_fc.dtype

    # Operand dtype follows the prepared weight (f32 default, optionally bf16);
    # accumulation stays f32 in the kernel either way.
    x_op = x if x.dtype == op_dtype else x.astype(op_dtype)

    # Pad the batch only to the sublane quantum (8 for f32, 16 for packed bf16)
    # — NOT to the tile size — then pick tm as an exact divisor of B_p below.
    sub = 16 if op_dtype == jnp.bfloat16 else 8
    B_p = _round_up(B, sub)
    if (B_p, F_p) != (B, F):
        x_op = jnp.pad(x_op, ((0, B_p - B), (0, F_p - F)))

    # Tile plan: large lane-dense tiles (caps 512/1024/1024 on M/N/K) that
    # divide the padded dims exactly -> no extra padding waste, fewer grid
    # steps, long DMAs at the HBM roofline.
    tm = _best_tile(B_p, sub, 512)
    tk = _best_tile(F_p, 128, 1024)
    tn = _best_tile(C_p, 128, 1024)
    ni, nj, nk = B_p // tm, C_p // tn, F_p // tk
    # v7x has 2 TensorCores: expose >= 2 "parallel" output tiles so small-batch
    # heads do not leave a core idle.
    if ni * nj < 2 and C_p >= 256:
        tn = _best_tile(C_p, 128, max(128, tn // 2))
        nj = C_p // tn

    op_bytes = op_dtype.itemsize
    out_bytes = out_dtype.itemsize

    use_acc = out_dtype != jnp.float32
    kernel = _linear_kernel_acc if use_acc else _linear_kernel_f32out
    scratch = [pltpu.VMEM((tm, tn), jnp.float32)] if use_acc else []

    # Scoped-VMEM request: double-buffered blocks (+ optional acc), capped at
    # 48 MiB to leave headroom on v7x's 64 MiB physical VMEM.
    blk_bytes = 2 * (tm * tk * op_bytes + tk * tn * op_bytes + tn * 4
                     + tm * tn * out_bytes) + (tm * tn * 4 if use_acc else 0)
    vmem_limit = min(48 * 1024 * 1024,
                     max(32 * 1024 * 1024, int(blk_bytes * 3 // 2)))

    # bytes_accessed reflects re-reads for the (i, j, k) grid order:
    # x is re-streamed once per j-tile, the weight once per i-tile.
    cost = pl.CostEstimate(
        flops=2 * B_p * C_p * F_p,
        transcendentals=0,
        bytes_accessed=(B_p * F_p * op_bytes) * nj
        + (F_p * C_p * op_bytes) * ni
        + (C_p * 4) * ni
        + B_p * C_p * out_bytes,
    )

    y_p = pl.pallas_call(
        kernel,
        out_shape=jax.ShapeDtypeStruct((B_p, C_p), out_dtype),
        grid=(ni, nj, nk),
        in_specs=[
            pl.BlockSpec((tm, tk), lambda i, j, k: (i, k)),   # x tile
            pl.BlockSpec((tk, tn), lambda i, j, k: (k, j)),   # weight tile (F, C)
            pl.BlockSpec((1, tn), lambda i, j, k: (0, j)),    # bias: resident over K
        ],
        out_specs=pl.BlockSpec((tm, tn), lambda i, j, k: (i, j)),
        scratch_shapes=scratch,
        compiler_params=pltpu.CompilerParams(
            dimension_semantics=("parallel", "parallel", "arbitrary"),
            vmem_limit_bytes=vmem_limit,
        ),
        cost_estimate=cost,
    )(x_op, w_fc, b_row)

    return y_p[:B, :num_classes]


if __name__ == "__main__":
    # Small deterministic setup consistent with NormalClassifier(num_features, num_classes)
    batch = 8
    num_features = 32
    num_classes = 16

    key = jax.random.PRNGKey(0)
    kx, kw, kb = jax.random.split(key, 3)

    x = jax.random.normal(kx, (batch, num_features), dtype=jnp.float32)
    bound = 1.0 / jnp.sqrt(jnp.float32(num_features))
    weight = jax.random.uniform(kw, (num_classes, num_features),
                                minval=-bound, maxval=bound, dtype=jnp.float32)
    bias = jax.random.uniform(kb, (num_classes,),
                              minval=-bound, maxval=bound, dtype=jnp.float32)

    # One-time parameter prep (transpose + pad), cached across forward calls.
    w_fc, b_row = jax.block_until_ready(prepare_classifier_params(weight, bias))

    y = classifier_forward(x, w_fc, b_row, num_classes=num_classes)
    jax.block_until_ready(y)
    y_ref = x @ weight.T + bias
    assert y.shape == (batch, num_classes)
    assert jnp.allclose(y, y_ref, atol=1e-5, rtol=1e-5)

    # Non-aligned batch (exercises sublane padding + output slicing).
    x2 = jax.random.normal(kx, (5, num_features), dtype=jnp.float32)
    y2 = classifier_forward(x2, w_fc, b_row, num_classes=num_classes)
    jax.block_until_ready(y2)
    assert y2.shape == (5, num_classes)
    assert jnp.allclose(y2, x2 @ weight.T + bias, atol=1e-5, rtol=1e-5)

    # Multi-tile grid (nk=2 K-steps, nj=2 output tiles for megacore) with
    # integer-valued f32 data so the check is exact regardless of the MXU's
    # f32 pass decomposition.
    B3, F3, C3 = 24, 1280, 256
    k3x, k3w, k3b = jax.random.split(jax.random.PRNGKey(1), 3)
    x3 = jax.random.randint(k3x, (B3, F3), -4, 5).astype(jnp.float32)
    w3 = jax.random.randint(k3w, (C3, F3), -4, 5).astype(jnp.float32)
    b3 = jax.random.randint(k3b, (C3,), -4, 5).astype(jnp.float32)
    w3_fc, b3_row = prepare_classifier_params(w3, b3)
    y3 = classifier_forward(x3, w3_fc, b3_row, num_classes=C3)
    jax.block_until_ready(y3)
    assert y3.shape == (B3, C3)
    assert jnp.allclose(y3, x3 @ w3.T + b3, atol=1e-3, rtol=1e-3)

    print("KERNEL_OK")
</pallas_src>

<mosaic_0001>
module attributes {stable_mosaic.version = 11 : i64} {
  func.func @_linear_kernel_f32out(%arg0: i32, %arg1: i32, %arg2: i32, %arg3: memref<8x128xf32, #tpu.memory_space<vmem>>, %arg4: memref<128x128xf32, #tpu.memory_space<vmem>>, %arg5: memref<1x128xf32, #tpu.memory_space<vmem>>, %arg6: memref<8x128xf32, #tpu.memory_space<vmem>>) attributes {dimension_semantics = [#tpu.dimension_semantics<parallel>, #tpu.dimension_semantics<parallel>, #tpu.dimension_semantics<arbitrary>], iteration_bounds = array<i64: 1, 1, 1>, scalar_prefetch = 0 : i64, scratch_operands = 0 : i64, tpu.core_type = #tpu.core_type<tc>, window_params = [{transform_indices = @transform_0, window_bounds = array<i64: 8, 128>}, {transform_indices = @transform_1, window_bounds = array<i64: 128, 128>}, {transform_indices = @transform_2, window_bounds = array<i64: 1, 128>}, {transform_indices = @transform_3, window_bounds = array<i64: 8, 128>}]} {
    %c0 = arith.constant 0 : index
    %c0_0 = arith.constant 0 : index
    %0 = vector.load %arg3[%c0, %c0_0] : memref<8x128xf32, #tpu.memory_space<vmem>>, vector<8x128xf32>
    %c0_1 = arith.constant 0 : index
    %c0_2 = arith.constant 0 : index
    %1 = vector.load %arg4[%c0_1, %c0_2] : memref<128x128xf32, #tpu.memory_space<vmem>>, vector<128x128xf32>
    %cst = arith.constant dense<0.000000e+00> : vector<8x128xf32>
    %2 = tpu.matmul %0, %1, %cst {dimension_numbers = #tpu.dot_dimension_numbers<[1], [0], [0], [1], [0, 0, 1, 1], [], []>} : vector<8x128xf32>, vector<128x128xf32>, vector<8x128xf32> -> vector<8x128xf32>
    %c0_i32 = arith.constant 0 : i32
    %3 = arith.cmpi eq, %arg2, %c0_i32 : i32
    %4 = arith.extui %3 : i1 to i32
    %c0_i32_3 = arith.constant 0 : i32
    %5 = arith.cmpi ne, %4, %c0_i32_3 : i32
    scf.if %5 {
      %c0_8 = arith.constant 0 : index
      %c0_9 = arith.constant 0 : index
      %12 = vector.load %arg6[%c0_8, %c0_9] : memref<8x128xf32, #tpu.memory_space<vmem>>, vector<8x128xf32>
      tpu.vector_store %arg6[%c0_8, %c0_9], %2 {strides = array<i32>} : memref<8x128xf32, #tpu.memory_space<vmem>>, vector<8x128xf32>,
    } else {
    }
    %c0_i32_4 = arith.constant 0 : i32
    %6 = arith.cmpi ne, %arg2, %c0_i32_4 : i32
    %7 = arith.extui %6 : i1 to i32
    %c0_i32_5 = arith.constant 0 : i32
    %8 = arith.cmpi ne, %7, %c0_i32_5 : i32
    scf.if %8 {
      %c0_8 = arith.constant 0 : index
      %c0_9 = arith.constant 0 : index
      %12 = vector.load %arg6[%c0_8, %c0_9] : memref<8x128xf32, #tpu.memory_space<vmem>>, vector<8x128xf32>
      %13 = arith.addf %12, %2 : vector<8x128xf32>
      %c0_10 = arith.constant 0 : index
      %c0_11 = arith.constant 0 : index
      %14 = vector.load %arg6[%c0_10, %c0_11] : memref<8x128xf32, #tpu.memory_space<vmem>>, vector<8x128xf32>
      tpu.vector_store %arg6[%c0_10, %c0_11], %13 {strides = array<i32>} : memref<8x128xf32, #tpu.memory_space<vmem>>, vector<8x128xf32>,
    } else {
    }
    %c0_i32_6 = arith.constant 0 : i32
    %9 = arith.cmpi eq, %arg2, %c0_i32_6 : i32
    %10 = arith.extui %9 : i1 to i32
    %c0_i32_7 = arith.constant 0 : i32
    %11 = arith.cmpi ne, %10, %c0_i32_7 : i32
    scf.if %11 {
      %c0_8 = arith.constant 0 : index
      %c0_9 = arith.constant 0 : index
      %12 = vector.load %arg6[%c0_8, %c0_9] : memref<8x128xf32, #tpu.memory_space<vmem>>, vector<8x128xf32>
      %c0_10 = arith.constant 0 : index
      %c0_11 = arith.constant 0 : index
      %13 = vector.load %arg5[%c0_10, %c0_11] : memref<1x128xf32, #tpu.memory_space<vmem>>, vector<1x128xf32>
      %14 = vector.broadcast %13 : vector<1x128xf32> to vector<8x128xf32>
      %15 = arith.addf %12, %14 : vector<8x128xf32>
      %c0_12 = arith.constant 0 : index
      %c0_13 = arith.constant 0 : index
      %16 = vector.load %arg6[%c0_12, %c0_13] : memref<8x128xf32, #tpu.memory_space<vmem>>, vector<8x128xf32>
      tpu.vector_store %arg6[%c0_12, %c0_13], %15 {strides = array<i32>} : memref<8x128xf32, #tpu.memory_space<vmem>>, vector<8x128xf32>,
    } else {
    }
    return
  }
  func.func @transform_0(%arg0: i32, %arg1: i32, %arg2: i32) -> (i32, i32) {
    %c0_i32 = arith.constant 0 : i32
    return %arg0, %arg2 : i32, i32
  }
  func.func @transform_1(%arg0: i32, %arg1: i32, %arg2: i32) -> (i32, i32) {
    %c0_i32 = arith.constant 0 : i32
    return %arg2, %arg1 : i32, i32
  }
  func.func @transform_2(%arg0: i32, %arg1: i32, %arg2: i32) -> (i32, i32) {
    %c0_i32 = arith.constant 0 : i32
    %c0_i32_0 = arith.constant 0 : i32
    return %c0_i32, %arg1 : i32, i32
  }
  func.func @transform_3(%arg0: i32, %arg1: i32, %arg2: i32) -> (i32, i32) {
    %c0_i32 = arith.constant 0 : i32
    return %arg0, %arg1 : i32, i32
  }
}

</mosaic_0001>

<llo_original>
// kernel: classifier_forward.1
$region0: #{classifier_forward.1}
  #allocation0 [shape = 'u32[]', space=smem, size = 0x4, offset = 0x4, fixed_abs, tag = 'smem constant byte address 0x4 - core index']
  #allocation1 [shape = 'u32[72,128]{1,0:T(1,128)}', space=vmem, size = 0x9000, scoped, tag = 'internal scratch']
  %s0 = inlined_call_operand.vmem [shape: f32[8,128], index: 0, kind: input, shape index: {}]
  %s1 = inlined_call_operand.hbm [shape: f32[128,128], index: 1, kind: input, shape index: {}]
  %s2 = inlined_call_operand.vmem [shape: f32[1,128], index: 2, kind: input, shape index: {}]
  %s3 = inlined_call_operand.hbm [shape: f32[8,128], index: 3, kind: output, shape index: {}]
  %s4 = sld [smem:[#allocation0]]
  $region38: #{classifier_forward.1} parent=0
    _
  %s6 = ssub.s32 1, %s4
  %s7 = scalar_select 0, %s6, %s4
  $region1: #{classifier_forward.1} parent=0
    #allocation2 [shape = 'u8[65536]{0}', space=vmem, size = 0x10000, scoped, tag = 'input window, operand 1, single buffered']
    #allocation3 [shape = 's32[1]{0}', space=sflag, size = 0x4, scoped, tag = 'scoped memory for classifier_forward.1']
    #allocation4 [shape = 's32[1]{0}', space=sflag, size = 0x4, scoped, tag = 'scoped memory for classifier_forward.1']
    #allocation5 [shape = 'u8[4096]{0}', space=vmem, size = 0x1000, scoped, tag = 'output window, operand 0, single buffered']
    %8 = vsyncpa [#allocation3], 0
    %9 = vsyncpa [#allocation4], 0
    // Predicated region
    $region2: #{classifier_forward.1} parent=1 // pred_check
      _
    $region3: #{classifier_forward.1} parent=1 // pred_check_branch
      %11 = sbr.rel (0) target = $region5
    $region4: #{classifier_forward.1} parent=1 // pred_region
      _
    $region5: #{classifier_forward.1} parent=1 // pred_fallthru
      _
    // Predicated region
    $region6: #{classifier_forward.1} parent=1 // pred_check
      _
    $region7: #{classifier_forward.1} parent=1 // pred_check_branch
      %13 = sbr.rel (0) target = $region9
    $region8: #{classifier_forward.1} parent=1 // pred_region
      %15 = vsyncadd [#allocation3], 0
      %s16 = sshll.u32 %s1, 4
      %s17 = int_to_ptr.hbm [resolvable:$true] %s16
      %s18 = sshll.u32 [#allocation2], 4
      %s19 = int_to_ptr.vmem [resolvable:$true] %s18
      %24 = dma.hbm_to_vmem [thread:$0]  %s17, 2048, %s19, [#allocation3], 128, 128, 8
    $region9: #{classifier_forward.1} parent=1 // pred_fallthru
      _
    // Predicated region
    $region10: #{classifier_forward.1} parent=1 // pred_check
      _
    $region11: #{classifier_forward.1} parent=1 // pred_check_branch
      %26 = sbr.rel (0) target = $region13
    $region12: #{classifier_forward.1} parent=1 // pred_region
      _
    $region13: #{classifier_forward.1} parent=1 // pred_fallthru
      _
    // Predicated region
    $region14: #{classifier_forward.1} parent=1 // pred_check
      _
    $region15: #{classifier_forward.1} parent=1 // pred_check_branch
      %28 = sbr.rel (0) target = $region17
    $region16: #{classifier_forward.1} parent=1 // pred_region
      %30 = dma.done [#allocation3], 2048
    $region17: #{classifier_forward.1} parent=1 // pred_fallthru
      _
    %v31 = vld [vmem:[%s0] sm:$0xff]
    %v32 = vld [vmem:[#allocation2] sm:$0xff]
    %v33 = vld [vmem:[#allocation2 + $0x8] sm:$0xff]
    %v34 = vld [vmem:[#allocation2 + $0x10] sm:$0xff]
    %v35 = vld [vmem:[#allocation2 + $0x18] sm:$0xff]
    %v36 = vld [vmem:[#allocation2 + $0x20] sm:$0xff]
    %v37 = vld [vmem:[#allocation2 + $0x28] sm:$0xff]
    %v38 = vld [vmem:[#allocation2 + $0x30] sm:$0xff]
    %v39 = vld [vmem:[#allocation2 + $0x38] sm:$0xff]
    %v40 = vld [vmem:[#allocation2 + $0x40] sm:$0xff]
    %v41 = vld [vmem:[#allocation2 + $0x48] sm:$0xff]
    %v42 = vld [vmem:[#allocation2 + $0x50] sm:$0xff]
    %v43 = vld [vmem:[#allocation2 + $0x58] sm:$0xff]
    %v44 = vld [vmem:[#allocation2 + $0x60] sm:$0xff]
    %v45 = vld [vmem:[#allocation2 + $0x68] sm:$0xff]
    %v46 = vld [vmem:[#allocation2 + $0x70] sm:$0xff]
    %v47 = vld [vmem:[#allocation2 + $0x78] sm:$0xff]
    %48 = vmatpush.msra.mxu0 %v47
    %49 = vmatpush.msra.mxu0 %v46
    %50 = vmatpush.msra.mxu0 %v45
    %51 = vmatpush.msra.mxu0 %v44
    %52 = vmatpush.msra.mxu0 %v43
    %53 = vmatpush.msra.mxu0 %v42
    %54 = vmatpush.msra.mxu0 %v41
    %55 = vmatpush.msra.mxu0 %v40
    %56 = vmatpush.msra.mxu0 %v39
    %57 = vmatpush.msra.mxu0 %v38
    %58 = vmatpush.msra.mxu0 %v37
    %59 = vmatpush.msra.mxu0 %v36
    %60 = vmatpush.msra.mxu0 %v35
    %61 = vmatpush.msra.mxu0 %v34
    %62 = vmatpush.msra.mxu0 %v33
    %63 = vmatpush.msra.mxu0 %v32
    %64 = vmatmul.f32.gmra.mxu0 %v31
    %v65 = vpop.f32.mrf.mxu0
    %v66 = vadd.f32 0.0, %v65
    %67 = vdwg.mxu0
    %p68 = scmp.eq.s32.totalorder 0, 0
    // Predicated region
    $region18: #{classifier_forward.1} parent=1 // pred_check
      %p69 = pneg %p68
    $region19: #{classifier_forward.1} parent=1 // pred_check_branch
      %71 = sbr.rel (%p69) target = $region21
    $region20: #{classifier_forward.1} parent=1 // pred_region
      %72 = vst [vmem:[#allocation5] sm:$0xff] %v66
    $region21: #{classifier_forward.1} parent=1 // pred_fallthru
      _
    %p73 = scmp.ne.s32.totalorder 0, 0
    // Predicated region
    $region22: #{classifier_forward.1} parent=1 // pred_check
      %p74 = pneg %p73
    $region23: #{classifier_forward.1} parent=1 // pred_check_branch
      %76 = sbr.rel (%p74) target = $region25
    $region24: #{classifier_forward.1} parent=1 // pred_region
      %v77 = vld [vmem:[#allocation5] sm:$0xff]
      %v78 = vadd.f32 %v77, %v66
      %79 = vst [vmem:[#allocation5] sm:$0xff] %v78
    $region25: #{classifier_forward.1} parent=1 // pred_fallthru
      _
    // Predicated region
    $region26: #{classifier_forward.1} parent=1 // pred_check
      %p80 = pneg %p68
    $region27: #{classifier_forward.1} parent=1 // pred_check_branch
      %82 = sbr.rel (%p80) target = $region29
    $region28: #{classifier_forward.1} parent=1 // pred_region
      %v83 = vld [vmem:[#allocation5] sm:$0xff]
      %v84 = vld [vmem:[%s2] sm:$0x1]
      %v86 = vperm.slane %v84, 0
      %v88 = vadd.f32 %v83, %v86
      %89 = vst [vmem:[#allocation5] sm:$0xff] %v88
    $region29: #{classifier_forward.1} parent=1 // pred_fallthru
      _
    // Predicated region
    $region30: #{classifier_forward.1} parent=1 // pred_check
      _
    $region31: #{classifier_forward.1} parent=1 // pred_check_branch
      %91 = sbr.rel (0) target = $region33
    $region32: #{classifier_forward.1} parent=1 // pred_region
      %93 = vsyncadd [#allocation4], 0
      %s95 = sshll.u32 [#allocation5], 4
      %s96 = int_to_ptr.vmem [resolvable:$true] %s95
      %s97 = sshll.u32 %s3, 4
      %s98 = int_to_ptr.hbm [resolvable:$true] %s97
      %100 = dma.vmem_to_hbm [thread:$0]  %s96, 128, %s98, [#allocation4]
    $region33: #{classifier_forward.1} parent=1 // pred_fallthru
      _
    // Predicated region
    $region34: #{classifier_forward.1} parent=1 // pred_check
      _
    $region35: #{classifier_forward.1} parent=1 // pred_check_branch
      %102 = sbr.rel (0) target = $region37
    $region36: #{classifier_forward.1} parent=1 // pred_region
      %104 = dma.done [#allocation4], 128
    $region37: #{classifier_forward.1} parent=1 // pred_fallthru
      _
    %105 = vsyncpa [#allocation3], 1
    %106 = vsyncpa [#allocation4], 1

</llo_original>
